<compile_context>
chip_gen: v7x
topology: tpu7x:2x2x1
jax: 0.10.0
libtpu: 0.0.40
codegen_flags: <defaults>
</compile_context>

<pallas_src>
import functools

import jax
import jax.numpy as jnp
from jax import lax
from jax.experimental import pallas as pl
from jax.experimental.pallas import tpu as pltpu

OTHER = 1.0  # self.other in the PyTorch module


def fused_linear_kernel(x_ref, w_ref, b_ref, o_ref):
    # out = x @ Wf + bf   (algebraically identical to Linear1 -> +other -> Linear2)
    acc = jnp.dot(x_ref[...], w_ref[...], preferred_element_type=jnp.float32)
    o_ref[...] = (acc + b_ref[...]).astype(o_ref.dtype)


def fuse_params(w1, b1, w2, b2, other=OTHER):
    """One-time exact algebraic fusion: (x@W1 + b1 + other)@W2 + b2 == x@Wf + bf.

    w1: (64, 32), b1: (32,), w2: (32, 8), b2: (8,)  — [in, out] layout.
    Returns Wf: (64, 8) f32, bf: (1, 8) f32.
    """
    w1 = w1.astype(jnp.float32)
    w2 = w2.astype(jnp.float32)
    w_fused = jnp.dot(w1, w2, precision=lax.Precision.HIGHEST)                    # (64, 8)
    b_fused = (jnp.dot(b1.astype(jnp.float32) + other, w2,
                       precision=lax.Precision.HIGHEST)
               + b2.astype(jnp.float32))                                          # (8,)
    return w_fused, b_fused.reshape(1, -1)


def _round_up(x, m):
    return ((x + m - 1) // m) * m


@functools.partial(jax.jit, static_argnames=("tb", "cast_bf16"))
def mlp_forward_fused(x, w_fused, b_fused, *, tb=1024, cast_bf16=False):
    """x: (B, 64) -> (B, 8) using the pre-fused (Wf, bf)."""
    B, K = x.shape
    N = w_fused.shape[1]
    out_dtype = x.dtype

    # --- batch-tile selection ------------------------------------------------
    if B <= 16:
        # Tiny batch: a single block whose dims equal the array dims (legal even
        # when not a multiple of 8); launch overhead dominates here anyway.
        tb_eff = B
    else:
        # Cap by `tb`, keep the tile sublane-aligned (multiple of 8), and keep
        # the grid length >= 2 so both v7x TensorCores get work.
        tb_eff = min(tb, _round_up(max(8, B // 2), 8))

    Bp = _round_up(B, tb_eff)
    if Bp != B:
        x = jnp.pad(x, ((0, Bp - B), (0, 0)))  # padded rows are sliced off below
    grid = (Bp // tb_eff,)

    x_in = x.astype(jnp.bfloat16) if cast_bf16 else x
    w_in = w_fused.astype(jnp.bfloat16) if cast_bf16 else w_fused

    out = pl.pallas_call(
        fused_linear_kernel,
        out_shape=jax.ShapeDtypeStruct((Bp, N), out_dtype),
        grid_spec=pl.GridSpec(
            grid=grid,
            in_specs=[
                # x: one batch tile per grid step (double-buffered by Pallas)
                pl.BlockSpec((tb_eff, K), lambda i: (i, 0),
                             memory_space=pltpu.MemorySpace.VMEM),
                # fused weight + bias: pinned VMEM-resident across all steps
                pl.BlockSpec((K, N), lambda i: (0, 0),
                             memory_space=pltpu.MemorySpace.VMEM),
                pl.BlockSpec((1, N), lambda i: (0, 0),
                             memory_space=pltpu.MemorySpace.VMEM),
            ],
            out_specs=pl.BlockSpec((tb_eff, N), lambda i: (i, 0),
                                   memory_space=pltpu.MemorySpace.VMEM),
        ),
        compiler_params=pltpu.CompilerParams(
            dimension_semantics=("parallel",),  # v7x: shard batch loop over 2 TCs
        ),
    )(x_in, w_in, b_fused)

    return out[:B]


if __name__ == "__main__":
    key = jax.random.PRNGKey(0)
    kx, k1, k2, k3, k4, kb, kr = jax.random.split(key, 7)

    # Module's example input: torch.randn(1, 64)
    x1 = jax.random.normal(kx, (1, 64), dtype=jnp.float32)

    # Linear(64,32) and Linear(32,8) params, stored as [in, out].
    w1 = jax.random.normal(k1, (64, 32), dtype=jnp.float32) * (1.0 / jnp.sqrt(64.0))
    b1 = jax.random.normal(k2, (32,), dtype=jnp.float32) * 0.01
    w2 = jax.random.normal(k3, (32, 8), dtype=jnp.float32) * (1.0 / jnp.sqrt(32.0))
    b2 = jax.random.normal(k4, (8,), dtype=jnp.float32) * 0.01

    def ref_fn(x):
        # Unfused reference: Linear1 -> +other -> Linear2
        h = jnp.dot(x, w1, precision=lax.Precision.HIGHEST) + b1 + OTHER
        return jnp.dot(h, w2, precision=lax.Precision.HIGHEST) + b2

    # One-time parameter fusion (the "init" step).
    w_fused, b_fused = fuse_params(w1, b1, w2, b2)
    w_fused, b_fused = jax.block_until_ready((w_fused, b_fused))

    # 1) Module-shaped call (B = 1), as in the PyTorch spec.
    out1 = mlp_forward_fused(x1, w_fused, b_fused)
    jax.block_until_ready(out1)
    assert out1.shape == (1, 8)
    assert jnp.allclose(out1, ref_fn(x1), atol=1e-4, rtol=1e-4)

    # 2) Batched call exercising the tiled / "parallel" path (B = 256 -> 2 steps of 128).
    xb = jax.random.normal(kb, (256, 64), dtype=jnp.float32)
    outb = mlp_forward_fused(xb, w_fused, b_fused)
    jax.block_until_ready(outb)
    assert outb.shape == (256, 8)
    assert jnp.allclose(outb, ref_fn(xb), atol=1e-4, rtol=1e-4)

    # 3) Ragged batch (B = 300): padded to a tile multiple inside the jit, then sliced.
    xr = jax.random.normal(kr, (300, 64), dtype=jnp.float32)
    outr = mlp_forward_fused(xr, w_fused, b_fused)
    jax.block_until_ready(outr)
    assert outr.shape == (300, 8)
    assert jnp.allclose(outr, ref_fn(xr), atol=1e-4, rtol=1e-4)

    # 4) Optional bf16 operand path (halves the dominant HBM read stream); loose tolerance.
    outb_bf16 = mlp_forward_fused(xb, w_fused, b_fused, cast_bf16=True)
    jax.block_until_ready(outb_bf16)
    assert outb_bf16.shape == (256, 8)
    assert jnp.allclose(outb_bf16, ref_fn(xb), atol=0.25, rtol=0.05)

    print("KERNEL_OK")
</pallas_src>

<mosaic_0001>
module attributes {stable_mosaic.version = 11 : i64} {
  func.func @fused_linear_kernel(%arg0: i32, %arg1: memref<1x64xf32, #tpu.memory_space<vmem>>, %arg2: memref<64x8xf32, #tpu.memory_space<vmem>>, %arg3: memref<1x8xf32, #tpu.memory_space<vmem>>, %arg4: memref<1x8xf32, #tpu.memory_space<vmem>>) attributes {dimension_semantics = [#tpu.dimension_semantics<parallel>], iteration_bounds = array<i64: 1>, scalar_prefetch = 0 : i64, scratch_operands = 0 : i64, tpu.core_type = #tpu.core_type<tc>, window_params = [{transform_indices = @transform_0, window_bounds = array<i64: 1, 64>}, {pipeline_mode = #tpu.pipeline_mode<synchronous>, transform_indices = @transform_1, window_bounds = array<i64: 64, 8>}, {pipeline_mode = #tpu.pipeline_mode<synchronous>, transform_indices = @transform_2, window_bounds = array<i64: 1, 8>}, {transform_indices = @transform_3, window_bounds = array<i64: 1, 8>}]} {
    %c0 = arith.constant 0 : index
    %c0_0 = arith.constant 0 : index
    %0 = vector.load %arg1[%c0, %c0_0] : memref<1x64xf32, #tpu.memory_space<vmem>>, vector<1x64xf32>
    %c0_1 = arith.constant 0 : index
    %c0_2 = arith.constant 0 : index
    %1 = vector.load %arg2[%c0_1, %c0_2] : memref<64x8xf32, #tpu.memory_space<vmem>>, vector<64x8xf32>
    %cst = arith.constant dense<0.000000e+00> : vector<1x8xf32>
    %2 = tpu.matmul %0, %1, %cst {dimension_numbers = #tpu.dot_dimension_numbers<[1], [0], [0], [1], [0, 0, 1, 1], [], []>} : vector<1x64xf32>, vector<64x8xf32>, vector<1x8xf32> -> vector<1x8xf32>
    %c0_3 = arith.constant 0 : index
    %c0_4 = arith.constant 0 : index
    %3 = vector.load %arg3[%c0_3, %c0_4] : memref<1x8xf32, #tpu.memory_space<vmem>>, vector<1x8xf32>
    %4 = arith.addf %2, %3 : vector<1x8xf32>
    %c0_5 = arith.constant 0 : index
    %c0_6 = arith.constant 0 : index
    %5 = vector.load %arg4[%c0_5, %c0_6] : memref<1x8xf32, #tpu.memory_space<vmem>>, vector<1x8xf32>
    tpu.vector_store %arg4[%c0_5, %c0_6], %4 {strides = array<i32>} : memref<1x8xf32, #tpu.memory_space<vmem>>, vector<1x8xf32>,
    return
  }
  func.func @transform_0(%arg0: i32) -> (i32, i32) {
    %c0_i32 = arith.constant 0 : i32
    %c0_i32_0 = arith.constant 0 : i32
    return %arg0, %c0_i32 : i32, i32
  }
  func.func @transform_1(%arg0: i32) -> (i32, i32) {
    %c0_i32 = arith.constant 0 : i32
    %c0_i32_0 = arith.constant 0 : i32
    %c0_i32_1 = arith.constant 0 : i32
    return %c0_i32, %c0_i32_0 : i32, i32
  }
  func.func @transform_2(%arg0: i32) -> (i32, i32) {
    %c0_i32 = arith.constant 0 : i32
    %c0_i32_0 = arith.constant 0 : i32
    %c0_i32_1 = arith.constant 0 : i32
    return %c0_i32, %c0_i32_0 : i32, i32
  }
  func.func @transform_3(%arg0: i32) -> (i32, i32) {
    %c0_i32 = arith.constant 0 : i32
    %c0_i32_0 = arith.constant 0 : i32
    return %arg0, %c0_i32 : i32, i32
  }
}

</mosaic_0001>

<llo_original>
// kernel: mlp_forward_fused.1
$region0: #{mlp_forward_fused.1}
  #allocation0 [shape = 'u32[]', space=smem, size = 0x4, offset = 0x4, fixed_abs, tag = 'smem constant byte address 0x4 - core index']
  #allocation1 [shape = 'u32[144,128]{1,0:T(1,128)}', space=vmem, size = 0x12000, scoped, tag = 'internal scratch']
  %s0 = inlined_call_operand.vmem [shape: f32[1,64], index: 0, kind: input, shape index: {}]
  %s1 = inlined_call_operand.vmem [shape: f32[64,8], index: 1, kind: input, shape index: {}]
  %s2 = inlined_call_operand.vmem [shape: f32[1,8], index: 2, kind: input, shape index: {}]
  %s3 = inlined_call_operand.hbm [shape: f32[1,8], index: 3, kind: output, shape index: {}]
  %s4 = sld [smem:[#allocation0]]
  $region22: #{mlp_forward_fused.1} parent=0
    _
  %s6 = ssub.s32 1, %s4
  %s7 = scalar_select 0, %s6, %s4
  $region1: #{mlp_forward_fused.1} parent=0
    #allocation2 [shape = 'u8[512]{0}', space=vmem, size = 0x400, scoped, tag = 'output window, operand 0, single buffered']
    #allocation3 [shape = 's32[1]{0}', space=sflag, size = 0x4, scoped, tag = 'scoped memory for mlp_forward_fused.1']
    %8 = vsyncpa [#allocation3], 0
    // Predicated region
    $region2: #{mlp_forward_fused.1} parent=1 // pred_check
      _
    $region3: #{mlp_forward_fused.1} parent=1 // pred_check_branch
      %10 = sbr.rel (0) target = $region5
    $region4: #{mlp_forward_fused.1} parent=1 // pred_region
      _
    $region5: #{mlp_forward_fused.1} parent=1 // pred_fallthru
      _
    // Predicated region
    $region6: #{mlp_forward_fused.1} parent=1 // pred_check
      _
    $region7: #{mlp_forward_fused.1} parent=1 // pred_check_branch
      %12 = sbr.rel (0) target = $region9
    $region8: #{mlp_forward_fused.1} parent=1 // pred_region
      _
    $region9: #{mlp_forward_fused.1} parent=1 // pred_fallthru
      _
    // Predicated region
    $region10: #{mlp_forward_fused.1} parent=1 // pred_check
      _
    $region11: #{mlp_forward_fused.1} parent=1 // pred_check_branch
      %14 = sbr.rel (0) target = $region13
    $region12: #{mlp_forward_fused.1} parent=1 // pred_region
      _
    $region13: #{mlp_forward_fused.1} parent=1 // pred_fallthru
      _
    %v15 = vld [vmem:[%s0] sm:$0x1]
    %v16 = vld [vmem:[%s1] sm:$0xff]
    %v17 = vld [vmem:[%s1 + $0x8] sm:$0xff]
    %v18 = vld [vmem:[%s1 + $0x10] sm:$0xff]
    %v19 = vld [vmem:[%s1 + $0x18] sm:$0xff]
    %v20 = vld [vmem:[%s1 + $0x20] sm:$0xff]
    %v21 = vld [vmem:[%s1 + $0x28] sm:$0xff]
    %v22 = vld [vmem:[%s1 + $0x30] sm:$0xff]
    %v23 = vld [vmem:[%s1 + $0x38] sm:$0xff]
    %v24 = vld [vmem:[%s2] sm:$0x1]
    %vm25 = vcmask 523264
    %v27 = vsel %vm25, %v15, 0
    %29 = vmatprep.subr.mxu0 0.0
    %30 = vmatpush1.msra.mxu0 %v16
    %31 = vmatprep.subr.mxu0 0.0
    %32 = vmatpush1.msra.mxu0 %v17
    %33 = vmatprep.subr.mxu0 0.0
    %34 = vmatpush1.msra.mxu0 %v18
    %35 = vmatprep.subr.mxu0 0.0
    %36 = vmatpush1.msra.mxu0 %v19
    %37 = vmatprep.subr.mxu0 0.0
    %38 = vmatpush1.msra.mxu0 %v20
    %39 = vmatprep.subr.mxu0 0.0
    %40 = vmatpush1.msra.mxu0 %v21
    %41 = vmatprep.subr.mxu0 0.0
    %42 = vmatpush1.msra.mxu0 %v22
    %43 = vmatprep.subr.mxu0 0.0
    %44 = vmatpush1.msra.mxu0 %v23
    %45 = vmatprep.subr.mxu0 0.0
    %46 = vmatpush1.msra.mxu0 0.0
    %47 = vmatprep.subr.mxu0 0.0
    %48 = vmatpush1.msra.mxu0 0.0
    %49 = vmatprep.subr.mxu0 0.0
    %50 = vmatpush1.msra.mxu0 0.0
    %51 = vmatprep.subr.mxu0 0.0
    %52 = vmatpush1.msra.mxu0 0.0
    %53 = vmatprep.subr.mxu0 0.0
    %54 = vmatpush1.msra.mxu0 0.0
    %55 = vmatprep.subr.mxu0 0.0
    %56 = vmatpush1.msra.mxu0 0.0
    %57 = vmatprep.subr.mxu0 0.0
    %58 = vmatpush1.msra.mxu0 0.0
    %59 = vmatprep.subr.mxu0 0.0
    %60 = vmatpush1.msra.mxu0 0.0
    %61 = vmatprep.subr.mxu0 0.0
    %62 = vmatpush1.msra.mxu0 0.0
    %63 = vmatprep.subr.mxu0 0.0
    %64 = vmatpush1.msra.mxu0 0.0
    %65 = vmatprep.subr.mxu0 0.0
    %66 = vmatpush1.msra.mxu0 0.0
    %67 = vmatprep.subr.mxu0 0.0
    %68 = vmatpush1.msra.mxu0 0.0
    %69 = vmatprep.subr.mxu0 0.0
    %70 = vmatpush1.msra.mxu0 0.0
    %71 = vmatprep.subr.mxu0 0.0
    %72 = vmatpush1.msra.mxu0 0.0
    %73 = vmatprep.subr.mxu0 0.0
    %74 = vmatpush1.msra.mxu0 0.0
    %75 = vmatprep.subr.mxu0 0.0
    %76 = vmatpush1.msra.mxu0 0.0
    %77 = vmatprep.subr.mxu0 0.0
    %78 = vmatpush1.msra.mxu0 0.0
    %79 = vmatprep.subr.mxu0 0.0
    %80 = vmatpush1.msra.mxu0 0.0
    %81 = vmatprep.subr.mxu0 0.0
    %82 = vmatpush1.msra.mxu0 0.0
    %83 = vmatprep.subr.mxu0 0.0
    %84 = vmatpush1.msra.mxu0 0.0
    %85 = vmatprep.subr.mxu0 0.0
    %86 = vmatpush1.msra.mxu0 0.0
    %87 = vmatprep.subr.mxu0 0.0
    %88 = vmatpush1.msra.mxu0 0.0
    %89 = vmatprep.subr.mxu0 0.0
    %90 = vmatpush1.msra.mxu0 0.0
    %91 = vmatprep.subr.mxu0 0.0
    %92 = vmatpush1.msra.mxu0 0.0
    %93 = vmatprep.mubr.f32.mxu0 0.0
    %94 = vmatmul.mubr.f32.gmra.mrb[0].mxu0 %v27
    %v95 = vpop.f32.mrb[0].mxu0
    %v96 = vadd.f32 %v24, %v95
    %v97 = vpop.f32.mrb[0].mxu0
    %98 = vdwg.mxu0
    %vm99 = vcmask 57344
    %100 = vst.msk [vmem:[#allocation2] sm:$0x1] %vm99, %v96
    // Predicated region
    $region14: #{mlp_forward_fused.1} parent=1 // pred_check
      _
    $region15: #{mlp_forward_fused.1} parent=1 // pred_check_branch
      %102 = sbr.rel (0) target = $region17
    $region16: #{mlp_forward_fused.1} parent=1 // pred_region
      %s104 = ssub.s32 16, 16
      %105 = vsyncadd [#allocation3], %s104
      %s107 = sshll.u32 [#allocation2], 4
      %s108 = int_to_ptr.vmem [resolvable:$true] %s107
      %110 = dma.vmem_to_hbm [thread:$0]  %s108, 16, %s3, [#allocation3]
    $region17: #{mlp_forward_fused.1} parent=1 // pred_fallthru
      _
    // Predicated region
    $region18: #{mlp_forward_fused.1} parent=1 // pred_check
      _
    $region19: #{mlp_forward_fused.1} parent=1 // pred_check_branch
      %112 = sbr.rel (0) target = $region21
    $region20: #{mlp_forward_fused.1} parent=1 // pred_region
      %113 = dma.done [#allocation3], 16
    $region21: #{mlp_forward_fused.1} parent=1 // pred_fallthru
      _
    %114 = vsyncpa [#allocation3], 1

</llo_original>
